<compile_context>
chip_gen: v6e
topology: v6e:2x2x1
jax: 0.10.0
libtpu: 0.0.40
codegen_flags: <defaults>
</compile_context>

<pallas_src>
import jax
import jax.numpy as jnp
from jax.experimental import pallas as pl
from jax.experimental.pallas import tpu as pltpu

_LANE = 128


# --------------------------------------------------------------------------- #
# Kernel
# --------------------------------------------------------------------------- #
def _proj_kernel(x_ref, w_ref, o_ref):
    # x_ref: (nb, C_in, tk)   w_ref: (C_out, C_in)   o_ref: (nb, C_out, tk)
    w = w_ref[...]
    for b in range(x_ref.shape[0]):            # static, small nb -> unrolled
        a = x_ref[b].astype(w.dtype)           # no-op if input already bf16
        o_ref[b] = jnp.dot(w, a, preferred_element_type=jnp.float32).astype(
            o_ref.dtype)


def _proj_matmul_nchw(x3, w, out_dtype, *, tk, nb, vmem_limit):
    """x3: (N, C_in, P_pad) with tk | P_pad, nb | N;  w: (C_out, C_in)."""
    n, c_in, p_pad = x3.shape
    c_out = w.shape[0]
    return pl.pallas_call(
        _proj_kernel,
        out_shape=jax.ShapeDtypeStruct((n, c_out, p_pad), out_dtype),
        grid_spec=pltpu.PrefetchScalarGridSpec(
            num_scalar_prefetch=0,
            grid=(n // nb, p_pad // tk),
            in_specs=[
                # activation block: nb images x full C_in x lane-dense tile
                pl.BlockSpec((nb, c_in, tk), lambda i, k: (i, 0, k)),
                # full weight, constant index_map -> DMA'd once, VMEM-resident
                pl.BlockSpec((c_out, c_in), lambda i, k: (0, 0)),
            ],
            out_specs=pl.BlockSpec((nb, c_out, tk), lambda i, k: (i, 0, k)),
        ),
        compiler_params=pltpu.CompilerParams(
            dimension_semantics=("parallel", "parallel"),
            vmem_limit_bytes=vmem_limit,
        ),
    )(x3, w)


# --------------------------------------------------------------------------- #
# Tiling plan (generation-aware)
# --------------------------------------------------------------------------- #
def _round_up(x, m):
    return ((x + m - 1) // m) * m


def _largest_divisor_leq(n, cap):
    cap = max(1, min(n, int(cap)))
    for d in range(cap, 0, -1):
        if n % d == 0:
            return d
    return 1


def _vmem_capacity_bytes():
    try:
        return int(pltpu.get_tpu_info().vmem_capacity_bytes)
    except Exception:
        return 64 << 20   # conservative default (v7x per-TensorCore VMEM)


def _plan_tiling(n, c_in, c_out, p, x_item, o_item, w_item,
                 spatial_tile=None, batch_block=None):
    """Pick (tk, p_pad, nb, vmem_limit); return None if weight can't stay VMEM-resident."""
    cap = _vmem_capacity_bytes()
    budget = min(cap // 2, 64 << 20)                 # 32 MiB on v7x, 64 MiB on v5e/v6e
    hw_tile_cap = 8192 if cap >= (96 << 20) else 4096

    weight_bytes = 2 * c_out * c_in * w_item         # double-buffered by the pipeline
    per_lane = 2 * (c_in * x_item + c_out * o_item)  # in+out, double-buffered, per lane

    avail = budget - weight_bytes - (2 << 20)        # pipeline / compiler slack
    if avail < _LANE * per_lane:
        return None                                  # too big -> XLA fallback

    tk_budget_cap = max(_LANE, (avail // per_lane) // _LANE * _LANE)
    tile_cap = min(hw_tile_cap, tk_budget_cap)

    p128 = _round_up(p, _LANE)
    if spatial_tile is not None:
        # Guard: force a 128-multiple so the output store stays unmasked.
        tk = _round_up(int(spatial_tile), _LANE)
        tk = max(_LANE, min(tk, tile_cap, p128))
        p_pad = _round_up(p, tk)
    else:
        # Largest 128-multiple divisor of p128 that fits the VMEM budget.
        m = p128 // _LANE
        best = 1
        for d in range(1, m + 1):
            if m % d == 0 and d * _LANE <= tile_cap:
                best = d
        tk = best * _LANE
        p_pad = p128

    # Batch several images per grid step when tiles are narrow (small P).
    per_batch = 2 * tk * (c_in * x_item + c_out * o_item)
    nb_budget = max(1, (budget - weight_bytes - (2 << 20)) // per_batch)
    if batch_block is not None:
        nb_want = max(1, int(batch_block))
    else:
        nb_want = -(-2048 // tk)                     # aim for ~2048 lanes of work / step
    nb = _largest_divisor_leq(n, min(nb_want, nb_budget))

    est = weight_bytes + nb * per_batch + (2 << 20)
    vmem_limit = int(min(max(est, 32 << 20), cap - (16 << 20)))
    return {"tk": tk, "p_pad": p_pad, "nb": nb, "vmem_limit": vmem_limit}


# --------------------------------------------------------------------------- #
# Module
# --------------------------------------------------------------------------- #
class ProjectionShortcut:
    """JAX/Pallas port of the PyTorch ProjectionShortcut module (NCHW I/O).

    Note: activations/weights are computed in `compute_dtype` (bf16 default,
    f32 accumulation on the MXU); pass compute_dtype=jnp.float32 for f32 parity.
    """

    def __init__(self, in_planes: int, out_planes: int, stride: int, *,
                 key=None, compute_dtype=jnp.bfloat16, out_dtype=None,
                 use_pallas=None, spatial_tile=None, batch_block=None):
        self.in_planes = in_planes
        self.out_planes = out_planes
        self.stride = stride
        self.compute_dtype = compute_dtype
        self.out_dtype = out_dtype            # None -> same dtype as the input
        self.use_pallas = use_pallas          # None -> auto heuristic
        self.spatial_tile = spatial_tile      # None -> auto from VMEM budget
        self.batch_block = batch_block        # None -> auto (nb*tk >= ~2048 lanes)
        self.requires_activation = stride != 1 or in_planes != out_planes
        if self.requires_activation:
            if key is None:
                key = jax.random.PRNGKey(0)
            fan_in = in_planes
            bound = (1.0 / fan_in) ** 0.5     # Conv2d kaiming-uniform(a=sqrt(5)), 1x1
            w4 = jax.random.uniform(
                key, (out_planes, in_planes, 1, 1),
                minval=-bound, maxval=bound, dtype=jnp.float32)
            # (C_out, C_in) in the compute dtype: bf16 MXU path + half the HBM reads.
            self.weight = w4[:, :, 0, 0].astype(compute_dtype)
        else:
            self.weight = None

    def __call__(self, x: jax.Array) -> jax.Array:
        if not self.requires_activation:
            return x
        n, c, h, w = x.shape
        s = self.stride
        ho = (h - 1) // s + 1
        wo = (w - 1) // s + 1
        p = ho * wo
        out_dtype = x.dtype if self.out_dtype is None else self.out_dtype

        use_pallas = self.use_pallas
        if use_pallas is None:
            # Tiny problems: per-step overhead + (8,128) padding dominate.
            use_pallas = (n * p >= 512) and (self.out_planes >= 64)

        plan = None
        if use_pallas:
            # Itemsize the kernel will actually read (bf16 if a wrapper pass runs).
            kernel_x_item = (jnp.dtype(self.compute_dtype).itemsize
                             if (s != 1 or p % _LANE != 0)
                             else jnp.dtype(x.dtype).itemsize)
            plan = _plan_tiling(
                n, c, self.out_planes, p,
                kernel_x_item, jnp.dtype(out_dtype).itemsize,
                jnp.dtype(self.weight.dtype).itemsize,
                spatial_tile=self.spatial_tile, batch_block=self.batch_block)
            if plan is None:          # weight won't stay VMEM-resident -> XLA path
                use_pallas = False

        if not use_pallas:
            xs = x[:, :, ::s, ::s] if s != 1 else x
            x3 = xs.reshape(n, c, p).astype(self.compute_dtype)
            y3 = jnp.einsum("ncp,oc->nop", x3, self.weight,
                            preferred_element_type=jnp.float32).astype(out_dtype)
            return y3.reshape(n, self.out_planes, ho, wo)

        tk, p_pad, nb, vmem_limit = (plan["tk"], plan["p_pad"], plan["nb"],
                                     plan["vmem_limit"])

        needs_pass = (s != 1) or (p_pad != p)
        if needs_pass:
            # One fused XLA pass: strided subsample (if any) + bf16 cast + lane pad.
            xs = x[:, :, ::s, ::s] if s != 1 else x
            x3 = xs.reshape(n, c, p).astype(self.compute_dtype)
            if p_pad != p:
                x3 = jnp.pad(x3, ((0, 0), (0, 0), (0, p_pad - p)))
        else:
            # No subsample, P already lane-dense: skip the wrapper pass entirely
            # and let the kernel cast each tile in-register.
            x3 = x.reshape(n, c, p)

        y3 = _proj_matmul_nchw(x3, self.weight, out_dtype,
                               tk=tk, nb=nb, vmem_limit=vmem_limit)

        if p_pad != p:
            y3 = y3[:, :, :p]     # fuses into the consumer (residual add) in a real net
        return y3.reshape(n, self.out_planes, ho, wo)


# --------------------------------------------------------------------------- #
# Self-test
# --------------------------------------------------------------------------- #
if __name__ == "__main__":
    key = jax.random.PRNGKey(0)
    kx, kw1, kx2, kx3 = jax.random.split(key, 4)

    # --- 1) stride-2 downsample projection (wrapper subsample+cast+pad path) ---
    N, C_in, H, W = 2, 4, 16, 16
    C_out, stride = 8, 2
    x = jax.random.normal(kx, (N, C_in, H, W), dtype=jnp.float32)

    proj = ProjectionShortcut(C_in, C_out, stride, key=kw1, use_pallas=True)
    y = jax.block_until_ready(proj(x))

    xs_ref = x[:, :, ::stride, ::stride].astype(jnp.bfloat16).astype(jnp.float32)
    w_ref = proj.weight.astype(jnp.float32)
    y_ref = jnp.einsum("nchw,oc->nohw", xs_ref, w_ref)
    assert y.shape == (N, C_out, H // stride, W // stride)
    assert jnp.allclose(y, y_ref, atol=1e-3, rtol=1e-3)

    # --- 2) stride-1 projection, ragged P=324 -> padded to 384, forced tile 128
    #        (exercises multi-tile grid + batch blocking nb=2) -------------------
    N2, C2_in, H2, W2, C2_out = 2, 8, 18, 18, 16
    x2 = jax.random.normal(kx2, (N2, C2_in, H2, W2), dtype=jnp.float32)
    proj2 = ProjectionShortcut(C2_in, C2_out, 1, key=kw1,
                               use_pallas=True, spatial_tile=128)
    y2 = jax.block_until_ready(proj2(x2))
    x2_bf = x2.astype(jnp.bfloat16).astype(jnp.float32)
    y2_ref = jnp.einsum("nchw,oc->nohw", x2_bf, proj2.weight.astype(jnp.float32))
    assert y2.shape == (N2, C2_out, H2, W2)
    assert jnp.allclose(y2, y2_ref, atol=1e-3, rtol=1e-3)

    # --- 3) stride-1 projection, P=256 already lane-dense: no wrapper pass,
    #        in-kernel cast path ------------------------------------------------
    x3 = jax.random.normal(kx3, (N, C_in, 16, 16), dtype=jnp.float32)
    proj3 = ProjectionShortcut(C_in, C_out, 1, key=kw1, use_pallas=True)
    y3 = jax.block_until_ready(proj3(x3))
    x3_bf = x3.astype(jnp.bfloat16).astype(jnp.float32)
    y3_ref = jnp.einsum("nchw,oc->nohw", x3_bf, proj3.weight.astype(jnp.float32))
    assert y3.shape == (N, C_out, 16, 16)
    assert jnp.allclose(y3, y3_ref, atol=1e-3, rtol=1e-3)

    # --- 4) identity path -------------------------------------------------------
    ident = ProjectionShortcut(C_in, C_in, 1)
    y_id = jax.block_until_ready(ident(x))
    assert jnp.array_equal(y_id, x)

    print("KERNEL_OK")
</pallas_src>

<mosaic_0001>
module attributes {stable_mosaic.version = 11 : i64} {
  func.func @_proj_kernel(%arg0: i32, %arg1: i32, %arg2: memref<2x4x128xbf16, #tpu.memory_space<vmem>>, %arg3: memref<8x4xbf16, #tpu.memory_space<vmem>>, %arg4: memref<2x8x128xf32, #tpu.memory_space<vmem>>) attributes {dimension_semantics = [#tpu.dimension_semantics<parallel>, #tpu.dimension_semantics<parallel>], iteration_bounds = array<i64: 1, 1>, scalar_prefetch = 0 : i64, scratch_operands = 0 : i64, tpu.core_type = #tpu.core_type<tc>, window_params = [{transform_indices = @transform_0, window_bounds = array<i64: 2, 4, 128>}, {pipeline_mode = #tpu.pipeline_mode<synchronous>, transform_indices = @transform_1, window_bounds = array<i64: 8, 4>}, {transform_indices = @transform_2, window_bounds = array<i64: 2, 8, 128>}]} {
    %c0 = arith.constant 0 : index
    %c0_0 = arith.constant 0 : index
    %0 = vector.load %arg3[%c0, %c0_0] : memref<8x4xbf16, #tpu.memory_space<vmem>>, vector<8x4xbf16>
    %c0_1 = arith.constant 0 : index
    %c0_2 = arith.constant 0 : index
    %c0_3 = arith.constant 0 : index
    %1 = vector.load %arg2[%c0_1, %c0_2, %c0_3] : memref<2x4x128xbf16, #tpu.memory_space<vmem>>, vector<1x4x128xbf16>
    %2 = vector.shape_cast %1 : vector<1x4x128xbf16> to vector<4x128xbf16>
    %cst = arith.constant dense<0.000000e+00> : vector<8x128xf32>
    %3 = tpu.matmul %0, %2, %cst {dimension_numbers = #tpu.dot_dimension_numbers<[1], [0], [0], [1], [0, 0, 1, 1], [], []>} : vector<8x4xbf16>, vector<4x128xbf16>, vector<8x128xf32> -> vector<8x128xf32>
    %c0_4 = arith.constant 0 : index
    %c0_5 = arith.constant 0 : index
    %c0_6 = arith.constant 0 : index
    %4 = vector.load %arg4[%c0_4, %c0_5, %c0_6] : memref<2x8x128xf32, #tpu.memory_space<vmem>>, vector<1x8x128xf32>
    %5 = vector.shape_cast %4 : vector<1x8x128xf32> to vector<8x128xf32>
    %6 = vector.shape_cast %3 : vector<8x128xf32> to vector<1x8x128xf32>
    tpu.vector_store %arg4[%c0_4, %c0_5, %c0_6], %6 {strides = array<i32>} : memref<2x8x128xf32, #tpu.memory_space<vmem>>, vector<1x8x128xf32>,
    %c1 = arith.constant 1 : index
    %c0_7 = arith.constant 0 : index
    %c0_8 = arith.constant 0 : index
    %7 = vector.load %arg2[%c1, %c0_7, %c0_8] : memref<2x4x128xbf16, #tpu.memory_space<vmem>>, vector<1x4x128xbf16>
    %8 = vector.shape_cast %7 : vector<1x4x128xbf16> to vector<4x128xbf16>
    %cst_9 = arith.constant dense<0.000000e+00> : vector<8x128xf32>
    %9 = tpu.matmul %0, %8, %cst_9 {dimension_numbers = #tpu.dot_dimension_numbers<[1], [0], [0], [1], [0, 0, 1, 1], [], []>} : vector<8x4xbf16>, vector<4x128xbf16>, vector<8x128xf32> -> vector<8x128xf32>
    %c1_10 = arith.constant 1 : index
    %c0_11 = arith.constant 0 : index
    %c0_12 = arith.constant 0 : index
    %10 = vector.load %arg4[%c1_10, %c0_11, %c0_12] : memref<2x8x128xf32, #tpu.memory_space<vmem>>, vector<1x8x128xf32>
    %11 = vector.shape_cast %10 : vector<1x8x128xf32> to vector<8x128xf32>
    %12 = vector.shape_cast %9 : vector<8x128xf32> to vector<1x8x128xf32>
    tpu.vector_store %arg4[%c1_10, %c0_11, %c0_12], %12 {strides = array<i32>} : memref<2x8x128xf32, #tpu.memory_space<vmem>>, vector<1x8x128xf32>,
    return
  }
  func.func @transform_0(%arg0: i32, %arg1: i32) -> (i32, i32, i32) {
    %c0_i32 = arith.constant 0 : i32
    %c0_i32_0 = arith.constant 0 : i32
    return %arg0, %c0_i32, %arg1 : i32, i32, i32
  }
  func.func @transform_1(%arg0: i32, %arg1: i32) -> (i32, i32) {
    %c0_i32 = arith.constant 0 : i32
    %c0_i32_0 = arith.constant 0 : i32
    %c0_i32_1 = arith.constant 0 : i32
    return %c0_i32, %c0_i32_0 : i32, i32
  }
  func.func @transform_2(%arg0: i32, %arg1: i32) -> (i32, i32, i32) {
    %c0_i32 = arith.constant 0 : i32
    %c0_i32_0 = arith.constant 0 : i32
    return %arg0, %c0_i32, %arg1 : i32, i32, i32
  }
}

</mosaic_0001>

<llo_original>
// kernel: tpu_custom_call.1
$region0: #{tpu_custom_call.1}
  #allocation0 [shape = 'u32[]', space=smem, size = 0x4, offset = 0x4, fixed_abs, tag = 'smem constant byte address 0x4 - core index']
  #allocation1 [shape = 'u32[144,128]{1,0:T(1,128)}', space=vmem, size = 0x12000, scoped, tag = 'internal scratch']
  %s0 = inlined_call_operand.vmem [shape: bf16[2,4,128], index: 0, kind: input, shape index: {}]
  %s1 = inlined_call_operand.vmem [shape: bf16[8,4], index: 1, kind: input, shape index: {}]
  %s2 = inlined_call_operand.hbm [shape: f32[2,8,128], index: 2, kind: output, shape index: {}]
  %s3 = sld [smem:[#allocation0]]
  $region18: #{tpu_custom_call.1} parent=0
    _
  %s5 = ssub.s32 1, %s3
  %s6 = scalar_select 0, %s5, %s3
  $region1: #{tpu_custom_call.1} parent=0
    #allocation2 [shape = 'u8[8192]{0}', space=vmem, size = 0x2000, scoped, tag = 'output window, operand 0, single buffered']
    #allocation3 [shape = 's32[1]{0}', space=sflag, size = 0x4, scoped, tag = 'scoped memory for tpu_custom_call.1']
    %7 = vsyncpa [#allocation3], 0
    // Predicated region
    $region2: #{tpu_custom_call.1} parent=1 // pred_check
      _
    $region3: #{tpu_custom_call.1} parent=1 // pred_check_branch
      %9 = sbr.rel (0) target = $region5
    $region4: #{tpu_custom_call.1} parent=1 // pred_region
      _
    $region5: #{tpu_custom_call.1} parent=1 // pred_fallthru
      _
    // Predicated region
    $region6: #{tpu_custom_call.1} parent=1 // pred_check
      _
    $region7: #{tpu_custom_call.1} parent=1 // pred_check_branch
      %11 = sbr.rel (0) target = $region9
    $region8: #{tpu_custom_call.1} parent=1 // pred_region
      _
    $region9: #{tpu_custom_call.1} parent=1 // pred_fallthru
      _
    %v13 = vld [vmem:[%s1] sm:$0xf]
    %v14 = vld [vmem:[%s0] sm:$0x3]
    %vm15 = vcmask 31744
    %v17 = vsel %vm15, %v13, 0
    %vm19 = vcmask 1041408
    %v21 = vsel %vm19, %v14, 0
    %23 = vmatprep.subr.bf16.mxu0 0
    %24 = vmatpush1.bf16.msra.mxu0 0
    %25 = vmatprep.subr.bf16.mxu0 0
    %26 = vmatpush1.bf16.msra.mxu0 0
    %27 = vmatprep.subr.bf16.mxu0 0
    %28 = vmatpush1.bf16.msra.mxu0 0
    %29 = vmatprep.subr.bf16.mxu0 0
    %30 = vmatpush1.bf16.msra.mxu0 0
    %31 = vmatprep.subr.bf16.mxu0 0
    %32 = vmatpush1.bf16.msra.mxu0 0
    %33 = vmatprep.subr.bf16.mxu0 0
    %34 = vmatpush1.bf16.msra.mxu0 0
    %35 = vmatprep.subr.bf16.mxu0 0
    %36 = vmatpush1.bf16.msra.mxu0 0
    %37 = vmatprep.subr.bf16.mxu0 0
    %38 = vmatpush1.bf16.msra.mxu0 %v21
    %39 = vmatprep.subr.bf16.mxu0 0
    %40 = vmatpush2.bf16.msra.mxu0 0
    %41 = vmatprep.subr.bf16.mxu0 0
    %42 = vmatpush2.bf16.msra.mxu0 0
    %43 = vmatprep.subr.bf16.mxu0 0
    %44 = vmatpush2.bf16.msra.mxu0 0
    %45 = vmatprep.subr.bf16.mxu0 0
    %46 = vmatpush2.bf16.msra.mxu0 0
    %47 = vmatprep.subr.bf16.mxu0 0
    %48 = vmatpush2.bf16.msra.mxu0 0
    %49 = vmatprep.subr.bf16.mxu0 0
    %50 = vmatpush2.bf16.msra.mxu0 0
    %51 = vmatprep.subr.bf16.mxu0 0
    %52 = vmatpush2.bf16.msra.mxu0 0
    %53 = vmatprep.subr.bf16.mxu0 0
    %54 = vmatpush2.bf16.msra.mxu0 0
    %55 = vmatprep.mubr.bf16.mxu0 0
    %56 = vmatmul.mubr.bf16.gmra.mxu0 %v17
    %v57 = vpop.f32.mrf.mxu0
    %v58 = vadd.f32 0.0, %v57
    %v59 = vpop.f32.mrf.mxu0
    %v60 = vpop.f32.mrf.mxu0
    %v61 = vpop.f32.mrf.mxu0
    %62 = vdwg.mxu0
    %63 = vst [vmem:[#allocation2] sm:$0xff] %v58
    %s64 = scalar_lea.vmem %s0, 2
    %v65 = vld [vmem:[%s64] sm:$0x3]
    %v67 = vsel %vm19, %v65, 0
    %69 = vmatprep.subr.bf16.mxu0 0
    %70 = vmatpush1.bf16.msra.mxu0 0
    %71 = vmatprep.subr.bf16.mxu0 0
    %72 = vmatpush1.bf16.msra.mxu0 0
    %73 = vmatprep.subr.bf16.mxu0 0
    %74 = vmatpush1.bf16.msra.mxu0 0
    %75 = vmatprep.subr.bf16.mxu0 0
    %76 = vmatpush1.bf16.msra.mxu0 0
    %77 = vmatprep.subr.bf16.mxu0 0
    %78 = vmatpush1.bf16.msra.mxu0 0
    %79 = vmatprep.subr.bf16.mxu0 0
    %80 = vmatpush1.bf16.msra.mxu0 0
    %81 = vmatprep.subr.bf16.mxu0 0
    %82 = vmatpush1.bf16.msra.mxu0 0
    %83 = vmatprep.subr.bf16.mxu0 0
    %84 = vmatpush1.bf16.msra.mxu0 %v67
    %85 = vmatprep.subr.bf16.mxu0 0
    %86 = vmatpush2.bf16.msra.mxu0 0
    %87 = vmatprep.subr.bf16.mxu0 0
    %88 = vmatpush2.bf16.msra.mxu0 0
    %89 = vmatprep.subr.bf16.mxu0 0
    %90 = vmatpush2.bf16.msra.mxu0 0
    %91 = vmatprep.subr.bf16.mxu0 0
    %92 = vmatpush2.bf16.msra.mxu0 0
    %93 = vmatprep.subr.bf16.mxu0 0
    %94 = vmatpush2.bf16.msra.mxu0 0
    %95 = vmatprep.subr.bf16.mxu0 0
    %96 = vmatpush2.bf16.msra.mxu0 0
    %97 = vmatprep.subr.bf16.mxu0 0
    %98 = vmatpush2.bf16.msra.mxu0 0
    %99 = vmatprep.subr.bf16.mxu0 0
    %100 = vmatpush2.bf16.msra.mxu0 0
    %101 = vmatprep.mubr.bf16.mxu0 0
    %102 = vmatmul.mubr.bf16.gmra.mxu0 %v17
    %v103 = vpop.f32.mrf.mxu0
    %v104 = vadd.f32 0.0, %v103
    %v105 = vpop.f32.mrf.mxu0
    %v106 = vpop.f32.mrf.mxu0
    %v107 = vpop.f32.mrf.mxu0
    %108 = vdwg.mxu0
    %s109 = scalar_lea.vmem [#allocation2], 8
    %110 = vst [vmem:[%s109] sm:$0xff] %v104
    // Predicated region
    $region10: #{tpu_custom_call.1} parent=1 // pred_check
      _
    $region11: #{tpu_custom_call.1} parent=1 // pred_check_branch
      %112 = sbr.rel (0) target = $region13
    $region12: #{tpu_custom_call.1} parent=1 // pred_region
      %s114 = ssub.s32 256, 256
      %115 = vsyncadd [#allocation3], %s114
      %s116 = sshll.u32 [#allocation2], 4
      %s117 = int_to_ptr.vmem [resolvable:$true] %s116
      %122 = dma.vmem_to_hbm [thread:$0]  %s117, 256, %s2, [#allocation3], 128, 128, 8
    $region13: #{tpu_custom_call.1} parent=1 // pred_fallthru
      _
    // Predicated region
    $region14: #{tpu_custom_call.1} parent=1 // pred_check
      _
    $region15: #{tpu_custom_call.1} parent=1 // pred_check_branch
      %124 = sbr.rel (0) target = $region17
    $region16: #{tpu_custom_call.1} parent=1 // pred_region
      %125 = dma.done [#allocation3], 256
    $region17: #{tpu_custom_call.1} parent=1 // pred_fallthru
      _
    %126 = vsyncpa [#allocation3], 1

</llo_original>
